<compile_context>
chip_gen: v7x
topology: tpu7x:2x2x1
jax: 0.10.0
libtpu: 0.0.40
codegen_flags: <defaults>
</compile_context>

<pallas_src>
import math

import jax
import jax.numpy as jnp
from jax import lax
from jax.experimental import pallas as pl
from jax.experimental.pallas import tpu as pltpu


def _round_up(x, m):
    return ((x + m - 1) // m) * m


# ----------------------------- Pallas kernels --------------------------------
def _make_small_kernel(compute_dtype):
    """Single-block kernel (B < one chunk): full-array blocks, no lane packing."""

    def kernel(z_ref, w1_ref, b1_ref, w2m_ref, b2m_ref, w2s_ref, b2s_ref,
               mu_ref, ga_ref):
        z = z_ref[...].astype(compute_dtype)
        h = jnp.dot(z, w1_ref[...], preferred_element_type=jnp.float32)
        h = jnp.maximum(h + b1_ref[...], 0.0).astype(compute_dtype)
        mu = jnp.dot(h, w2m_ref[...], preferred_element_type=jnp.float32) + b2m_ref[...]
        s = jnp.dot(h, w2s_ref[...], preferred_element_type=jnp.float32) + b2s_ref[...]
        ga = jnp.maximum(s, 0.0) + jnp.log1p(jnp.exp(-jnp.abs(s)))  # stable softplus
        mu_ref[...] = mu.astype(mu_ref.dtype)
        ga_ref[...] = ga.astype(ga_ref.dtype)

    return kernel


def _make_streaming_kernel(causal_size, pack, chunk, n_chunks, compute_dtype):
    """Batch-streaming kernel.

    Processes a (TB, R) z block in `n_chunks` chunks of `chunk` rows each.
    Per chunk: fused layer-1 dot, two zero-padded layer-2 dots, stable
    softplus, then a sublane->lane repack (via VMEM scratch + strided reads)
    into lane-dense (TB/pack, pack*C) output blocks.
    """
    C = causal_size
    chunkp = chunk // pack  # packed output rows produced per chunk

    def kernel(z_ref, w1_ref, b1_ref, w2m_ref, b2m_ref, w2s_ref, b2s_ref,
               mu_ref, ga_ref, *scratch):
        # Weights are tiny: load once, stay live across the chunk loop.
        w1 = w1_ref[...]
        b1 = b1_ref[...]
        w2m = w2m_ref[...]
        b2m = b2m_ref[...]
        w2s = w2s_ref[...]
        b2s = b2s_ref[...]

        def chunk_body(j, carry):
            r0 = j * chunk
            p0 = j * chunkp
            if not isinstance(j, int):
                r0 = pl.multiple_of(r0, chunk)
                p0 = pl.multiple_of(p0, chunkp)

            z = z_ref[pl.ds(r0, chunk), :].astype(compute_dtype)
            h = jnp.dot(z, w1, preferred_element_type=jnp.float32)
            h = jnp.maximum(h + b1, 0.0).astype(compute_dtype)
            mu = jnp.dot(h, w2m, preferred_element_type=jnp.float32) + b2m
            s = jnp.dot(h, w2s, preferred_element_type=jnp.float32) + b2s
            ga = jnp.maximum(s, 0.0) + jnp.log1p(jnp.exp(-jnp.abs(s)))

            if pack == 1:
                # Output already lane-dense (C is a multiple of 128).
                mu_ref[pl.ds(p0, chunkp), :] = mu.astype(mu_ref.dtype)
                ga_ref[pl.ds(p0, chunkp), :] = ga.astype(ga_ref.dtype)
            else:
                mu_scr, ga_scr = scratch
                mu_scr[...] = mu
                ga_scr[...] = ga
                # Sublane -> lane repack: packed[p, f*C + c] = x[p*pack + f, c].
                for f in range(pack):
                    src = pl.ds(f, chunkp, stride=pack)
                    lanes = pl.ds(f * C, C)
                    mu_ref[pl.ds(p0, chunkp), lanes] = mu_scr[src, :].astype(mu_ref.dtype)
                    ga_ref[pl.ds(p0, chunkp), lanes] = ga_scr[src, :].astype(ga_ref.dtype)
            return carry

        if n_chunks == 1:
            chunk_body(0, 0)
        else:
            lax.fori_loop(0, n_chunks, chunk_body, 0)

    return kernel


# ------------------------------ param fusion ----------------------------------
def fuse_abduction_params(params, compute_dtype=jnp.float32):
    """Fuse loc_net / scale_net parameters once (outside the hot path).

    w1  = [wl1 | ws1]       : [R, 2H]     b1  = [bl1 | bs1] : [1, 2H]
    w2m = [wl2 ; 0    ]     : [2H, C]     b2m = bl2         : [1, C]
    w2s = [0   ; ws2  ]     : [2H, C]     b2s = bs2         : [1, C]
    """
    R, H = params["wl1"].shape
    C = params["wl2"].shape[1]

    w1 = jnp.concatenate([params["wl1"], params["ws1"]], axis=1)
    b1 = jnp.concatenate([params["bl1"], params["bs1"]], axis=1)
    zeros_hc = jnp.zeros((H, C), jnp.float32)
    w2m = jnp.concatenate([params["wl2"], zeros_hc], axis=0)
    w2s = jnp.concatenate([zeros_hc, params["ws2"]], axis=0)

    # Only MXU inputs are cast; biases / elementwise math stay f32 (works on
    # every generation, incl. v5e which has no bf16 VPU/EUP).
    return dict(
        w1=w1.astype(compute_dtype), b1=b1.astype(jnp.float32),
        w2m=w2m.astype(compute_dtype), b2m=params["bl2"].astype(jnp.float32),
        w2s=w2s.astype(compute_dtype), b2s=params["bs2"].astype(jnp.float32),
        repre_size=R, hidden=H, causal_size=C, compute_dtype=compute_dtype,
    )


# ------------------------------- forward call ---------------------------------
def abduction_forward(z, fused, *, tile_batch=16384, chunk=1024,
                      core_parallel=False, vmem_limit_bytes=40 * 1024 * 1024):
    """z: [B, repre_size] float (f32 or bf16).  Returns (mu_U, gamma_U), each
    [B, causal_size] float32."""
    B, R = z.shape
    H = fused["hidden"]
    C = fused["causal_size"]
    cdt = fused["compute_dtype"]
    assert R == fused["repre_size"]

    # Lane-pack factor: smallest F with (F*C) % 128 == 0.
    F = 128 // math.gcd(C, 128)
    chunk_eff = _round_up(max(8, chunk), 8 * F)

    weight_args = (fused["w1"], fused["b1"], fused["w2m"], fused["b2m"],
                   fused["w2s"], fused["b2s"])
    weight_specs = [
        pl.BlockSpec((R, 2 * H), lambda i: (0, 0)),
        pl.BlockSpec((1, 2 * H), lambda i: (0, 0)),
        pl.BlockSpec((2 * H, C), lambda i: (0, 0)),
        pl.BlockSpec((1, C), lambda i: (0, 0)),
        pl.BlockSpec((2 * H, C), lambda i: (0, 0)),
        pl.BlockSpec((1, C), lambda i: (0, 0)),
    ]

    # core_parallel=True: real 2-TC sharding on v7x (keep grid length >= 2).
    sem = (pltpu.CORE_PARALLEL,) if core_parallel else ("parallel",)
    cparams = pltpu.CompilerParams(dimension_semantics=sem,
                                   vmem_limit_bytes=vmem_limit_bytes)

    if B < chunk_eff:
        # ---------------- small path: one full-array block -------------------
        mu, ga = pl.pallas_call(
            _make_small_kernel(cdt),
            out_shape=(jax.ShapeDtypeStruct((B, C), jnp.float32),
                       jax.ShapeDtypeStruct((B, C), jnp.float32)),
            grid=(1,),
            in_specs=[pl.BlockSpec((B, R), lambda i: (0, 0))] + weight_specs,
            out_specs=(pl.BlockSpec((B, C), lambda i: (0, 0)),
                       pl.BlockSpec((B, C), lambda i: (0, 0))),
            compiler_params=cparams,
        )(z, *weight_args)
        return mu, ga

    # -------------- streaming path: batch tiles, lane-packed outputs ---------
    TB = max(chunk_eff, (min(B, tile_batch) // chunk_eff) * chunk_eff)  # <= B
    n_chunks = TB // chunk_eff
    TBP = TB // F                       # packed output rows per block
    Gp = pl.cdiv(B, F)                  # total packed output rows
    grid = (pl.cdiv(Gp, TBP),)          # last block may be partial (masked)

    kernel = _make_streaming_kernel(C, F, chunk_eff, n_chunks, cdt)
    scratch = ([] if F == 1 else
               [pltpu.VMEM((chunk_eff, C), jnp.float32),
                pltpu.VMEM((chunk_eff, C), jnp.float32)])

    mu_p, ga_p = pl.pallas_call(
        kernel,
        out_shape=(jax.ShapeDtypeStruct((Gp, F * C), jnp.float32),
                   jax.ShapeDtypeStruct((Gp, F * C), jnp.float32)),
        grid=grid,
        in_specs=[pl.BlockSpec((TB, R), lambda i: (i, 0))] + weight_specs,
        out_specs=(pl.BlockSpec((TBP, F * C), lambda i: (i, 0)),
                   pl.BlockSpec((TBP, F * C), lambda i: (i, 0))),
        scratch_shapes=scratch,
        compiler_params=cparams,
    )(z, *weight_args)

    # Contiguous (free) reshape back to [rows, C]; prefix-slice only if B % F.
    Bp = Gp * F
    mu = mu_p.reshape(Bp, C)
    ga = ga_p.reshape(Bp, C)
    if Bp != B:
        mu = mu[:B]
        ga = ga[:B]
    return mu, ga


# --------------------------- parameter construction ---------------------------
def xavier_uniform(key, fan_in, fan_out):
    bound = math.sqrt(6.0 / (fan_in + fan_out))
    # stored as [in, out] so the kernel computes z @ W
    return jax.random.uniform(key, (fan_in, fan_out), jnp.float32, -bound, bound)


def init_abduction_params(key, repre_size, causal_size, hidden, gamma_init=10.0):
    k1, k2, k3, _ = jax.random.split(key, 4)

    # loc_net: xavier weights, zero biases
    wl1 = xavier_uniform(k1, repre_size, hidden)
    bl1 = jnp.zeros((1, hidden), jnp.float32)
    wl2 = xavier_uniform(k2, hidden, causal_size)
    bl2 = jnp.zeros((1, causal_size), jnp.float32)

    # scale_net: xavier weights / zero biases, except final layer:
    #   weight = 0, bias = log(exp(gamma_init) - 1)  (softplus inverse)
    ws1 = xavier_uniform(k3, repre_size, hidden)
    bs1 = jnp.zeros((1, hidden), jnp.float32)
    ws2 = jnp.zeros((hidden, causal_size), jnp.float32)
    init_bias = float(jnp.log(jnp.expm1(jnp.float32(gamma_init))))
    bs2 = jnp.full((1, causal_size), init_bias, jnp.float32)

    return dict(wl1=wl1, bl1=bl1, wl2=wl2, bl2=bl2,
                ws1=ws1, bs1=bs1, ws2=ws2, bs2=bs2)


# --------------------------------- reference ----------------------------------
def abduction_reference(z, p):
    h = jnp.maximum(z @ p["wl1"] + p["bl1"], 0.0)
    mu = h @ p["wl2"] + p["bl2"]
    hs = jnp.maximum(z @ p["ws1"] + p["bs1"], 0.0)
    s = hs @ p["ws2"] + p["bs2"]
    return mu, jax.nn.softplus(s)


if __name__ == "__main__":
    repre_size, causal_size, hidden = 16, 8, 32

    key = jax.random.PRNGKey(0)
    kz0, kp, kz1, kz2 = jax.random.split(key, 4)
    params = init_abduction_params(kp, repre_size, causal_size, hidden, gamma_init=10.0)
    fused_f32 = fuse_abduction_params(params, jnp.float32)

    # --- small path (B=8): single full-array block ---
    B0 = 8
    z0 = jax.random.normal(kz0, (B0, repre_size), jnp.float32)
    mu0, ga0 = abduction_forward(z0, fused_f32)
    jax.block_until_ready((mu0, ga0))
    mu0_r, ga0_r = abduction_reference(z0, params)
    assert mu0.shape == (B0, causal_size) and ga0.shape == (B0, causal_size)
    assert jnp.allclose(mu0, mu0_r, atol=1e-4), "mu mismatch (small path)"
    assert jnp.allclose(ga0, ga0_r, atol=1e-4), "gamma mismatch (small path)"
    assert bool(jnp.all(ga0 > 0.0)), "gamma must be positive"

    # --- streaming path, non-divisible B: lane packing + boundary masking ---
    B1 = 200
    z1 = jax.random.normal(kz1, (B1, repre_size), jnp.float32)
    mu1, ga1 = abduction_forward(z1, fused_f32, tile_batch=128, chunk=128)
    jax.block_until_ready((mu1, ga1))
    mu1_r, ga1_r = abduction_reference(z1, params)
    assert mu1.shape == (B1, causal_size) and ga1.shape == (B1, causal_size)
    assert jnp.allclose(mu1, mu1_r, atol=1e-4), "mu mismatch (streaming, ragged)"
    assert jnp.allclose(ga1, ga1_r, atol=1e-4), "gamma mismatch (streaming, ragged)"
    assert bool(jnp.all(ga1 > 0.0)), "gamma must be positive (streaming, ragged)"

    # --- streaming path, multi-block + multi-chunk (fori_loop) ---
    B2 = 512
    z2 = jax.random.normal(kz2, (B2, repre_size), jnp.float32)
    mu2, ga2 = abduction_forward(z2, fused_f32, tile_batch=256, chunk=128)
    jax.block_until_ready((mu2, ga2))
    mu2_r, ga2_r = abduction_reference(z2, params)
    assert jnp.allclose(mu2, mu2_r, atol=1e-4), "mu mismatch (streaming, tiled)"
    assert jnp.allclose(ga2, ga2_r, atol=1e-4), "gamma mismatch (streaming, tiled)"

    # --- bf16 MXU-input path (f32 accumulation, in-kernel cast) ---
    fused_bf16 = fuse_abduction_params(params, jnp.bfloat16)
    mu_b, ga_b = abduction_forward(z1, fused_bf16, tile_batch=128, chunk=128)
    jax.block_until_ready((mu_b, ga_b))
    assert jnp.allclose(mu_b, mu1_r, atol=1e-1), "mu mismatch (bf16)"
    assert jnp.allclose(ga_b, ga1_r, atol=1e-1), "gamma mismatch (bf16)"
    assert bool(jnp.all(ga_b > 0.0)), "gamma must be positive (bf16)"

    print("KERNEL_OK")
</pallas_src>

<mosaic_0001>
module attributes {stable_mosaic.version = 11 : i64} {
  func.func @kernel(%arg0: i32, %arg1: memref<8x16xf32, #tpu.memory_space<vmem>>, %arg2: memref<16x64xf32, #tpu.memory_space<vmem>>, %arg3: memref<1x64xf32, #tpu.memory_space<vmem>>, %arg4: memref<64x8xf32, #tpu.memory_space<vmem>>, %arg5: memref<1x8xf32, #tpu.memory_space<vmem>>, %arg6: memref<64x8xf32, #tpu.memory_space<vmem>>, %arg7: memref<1x8xf32, #tpu.memory_space<vmem>>, %arg8: memref<8x8xf32, #tpu.memory_space<vmem>>, %arg9: memref<8x8xf32, #tpu.memory_space<vmem>>) attributes {dimension_semantics = [#tpu.dimension_semantics<parallel>], iteration_bounds = array<i64: 1>, scalar_prefetch = 0 : i64, scratch_operands = 0 : i64, tpu.core_type = #tpu.core_type<tc>, window_params = [{pipeline_mode = #tpu.pipeline_mode<synchronous>, transform_indices = @transform_0, window_bounds = array<i64: 8, 16>}, {pipeline_mode = #tpu.pipeline_mode<synchronous>, transform_indices = @transform_1, window_bounds = array<i64: 16, 64>}, {pipeline_mode = #tpu.pipeline_mode<synchronous>, transform_indices = @transform_2, window_bounds = array<i64: 1, 64>}, {pipeline_mode = #tpu.pipeline_mode<synchronous>, transform_indices = @transform_3, window_bounds = array<i64: 64, 8>}, {pipeline_mode = #tpu.pipeline_mode<synchronous>, transform_indices = @transform_4, window_bounds = array<i64: 1, 8>}, {pipeline_mode = #tpu.pipeline_mode<synchronous>, transform_indices = @transform_5, window_bounds = array<i64: 64, 8>}, {pipeline_mode = #tpu.pipeline_mode<synchronous>, transform_indices = @transform_6, window_bounds = array<i64: 1, 8>}, {pipeline_mode = #tpu.pipeline_mode<synchronous>, transform_indices = @transform_7, window_bounds = array<i64: 8, 8>}, {pipeline_mode = #tpu.pipeline_mode<synchronous>, transform_indices = @transform_8, window_bounds = array<i64: 8, 8>}]} {
    %c0 = arith.constant 0 : index
    %c0_0 = arith.constant 0 : index
    %0 = vector.load %arg1[%c0, %c0_0] : memref<8x16xf32, #tpu.memory_space<vmem>>, vector<8x16xf32>
    %c0_1 = arith.constant 0 : index
    %c0_2 = arith.constant 0 : index
    %1 = vector.load %arg2[%c0_1, %c0_2] : memref<16x64xf32, #tpu.memory_space<vmem>>, vector<16x64xf32>
    %cst = arith.constant dense<0.000000e+00> : vector<8x64xf32>
    %2 = tpu.matmul %0, %1, %cst {dimension_numbers = #tpu.dot_dimension_numbers<[1], [0], [0], [1], [0, 0, 1, 1], [], []>} : vector<8x16xf32>, vector<16x64xf32>, vector<8x64xf32> -> vector<8x64xf32>
    %c0_3 = arith.constant 0 : index
    %c0_4 = arith.constant 0 : index
    %3 = vector.load %arg3[%c0_3, %c0_4] : memref<1x64xf32, #tpu.memory_space<vmem>>, vector<1x64xf32>
    %4 = vector.broadcast %3 : vector<1x64xf32> to vector<8x64xf32>
    %5 = arith.addf %2, %4 : vector<8x64xf32>
    %cst_5 = arith.constant 0.000000e+00 : f32
    %6 = vector.broadcast %cst_5 : f32 to vector<8x64xf32>
    %7 = arith.maximumf %5, %6 : vector<8x64xf32>
    %c0_6 = arith.constant 0 : index
    %c0_7 = arith.constant 0 : index
    %8 = vector.load %arg4[%c0_6, %c0_7] : memref<64x8xf32, #tpu.memory_space<vmem>>, vector<64x8xf32>
    %cst_8 = arith.constant dense<0.000000e+00> : vector<8x8xf32>
    %9 = tpu.matmul %7, %8, %cst_8 {dimension_numbers = #tpu.dot_dimension_numbers<[1], [0], [0], [1], [0, 0, 1, 1], [], []>} : vector<8x64xf32>, vector<64x8xf32>, vector<8x8xf32> -> vector<8x8xf32>
    %c0_9 = arith.constant 0 : index
    %c0_10 = arith.constant 0 : index
    %10 = vector.load %arg5[%c0_9, %c0_10] : memref<1x8xf32, #tpu.memory_space<vmem>>, vector<1x8xf32>
    %11 = vector.broadcast %10 : vector<1x8xf32> to vector<8x8xf32>
    %12 = arith.addf %9, %11 : vector<8x8xf32>
    %c0_11 = arith.constant 0 : index
    %c0_12 = arith.constant 0 : index
    %13 = vector.load %arg6[%c0_11, %c0_12] : memref<64x8xf32, #tpu.memory_space<vmem>>, vector<64x8xf32>
    %cst_13 = arith.constant dense<0.000000e+00> : vector<8x8xf32>
    %14 = tpu.matmul %7, %13, %cst_13 {dimension_numbers = #tpu.dot_dimension_numbers<[1], [0], [0], [1], [0, 0, 1, 1], [], []>} : vector<8x64xf32>, vector<64x8xf32>, vector<8x8xf32> -> vector<8x8xf32>
    %c0_14 = arith.constant 0 : index
    %c0_15 = arith.constant 0 : index
    %15 = vector.load %arg7[%c0_14, %c0_15] : memref<1x8xf32, #tpu.memory_space<vmem>>, vector<1x8xf32>
    %16 = vector.broadcast %15 : vector<1x8xf32> to vector<8x8xf32>
    %17 = arith.addf %14, %16 : vector<8x8xf32>
    %cst_16 = arith.constant 0.000000e+00 : f32
    %18 = vector.broadcast %cst_16 : f32 to vector<8x8xf32>
    %19 = arith.maximumf %17, %18 : vector<8x8xf32>
    %20 = math.absf %17 : vector<8x8xf32>
    %cst_17 = arith.constant 0.000000e+00 : f32
    %21 = vector.broadcast %cst_17 : f32 to vector<8x8xf32>
    %22 = arith.subf %21, %20 : vector<8x8xf32>
    %23 = math.exp %22 : vector<8x8xf32>
    %24 = math.log1p %23 : vector<8x8xf32>
    %25 = arith.addf %19, %24 : vector<8x8xf32>
    %c0_18 = arith.constant 0 : index
    %c0_19 = arith.constant 0 : index
    %26 = vector.load %arg8[%c0_18, %c0_19] : memref<8x8xf32, #tpu.memory_space<vmem>>, vector<8x8xf32>
    tpu.vector_store %arg8[%c0_18, %c0_19], %12 {strides = array<i32>} : memref<8x8xf32, #tpu.memory_space<vmem>>, vector<8x8xf32>,
    %c0_20 = arith.constant 0 : index
    %c0_21 = arith.constant 0 : index
    %27 = vector.load %arg9[%c0_20, %c0_21] : memref<8x8xf32, #tpu.memory_space<vmem>>, vector<8x8xf32>
    tpu.vector_store %arg9[%c0_20, %c0_21], %25 {strides = array<i32>} : memref<8x8xf32, #tpu.memory_space<vmem>>, vector<8x8xf32>,
    return
  }
  func.func @transform_0(%arg0: i32) -> (i32, i32) {
    %c0_i32 = arith.constant 0 : i32
    %c0_i32_0 = arith.constant 0 : i32
    %c0_i32_1 = arith.constant 0 : i32
    return %c0_i32, %c0_i32_0 : i32, i32
  }
  func.func @transform_1(%arg0: i32) -> (i32, i32) {
    %c0_i32 = arith.constant 0 : i32
    %c0_i32_0 = arith.constant 0 : i32
    %c0_i32_1 = arith.constant 0 : i32
    return %c0_i32, %c0_i32_0 : i32, i32
  }
  func.func @transform_2(%arg0: i32) -> (i32, i32) {
    %c0_i32 = arith.constant 0 : i32
    %c0_i32_0 = arith.constant 0 : i32
    %c0_i32_1 = arith.constant 0 : i32
    return %c0_i32, %c0_i32_0 : i32, i32
  }
  func.func @transform_3(%arg0: i32) -> (i32, i32) {
    %c0_i32 = arith.constant 0 : i32
    %c0_i32_0 = arith.constant 0 : i32
    %c0_i32_1 = arith.constant 0 : i32
    return %c0_i32, %c0_i32_0 : i32, i32
  }
  func.func @transform_4(%arg0: i32) -> (i32, i32) {
    %c0_i32 = arith.constant 0 : i32
    %c0_i32_0 = arith.constant 0 : i32
    %c0_i32_1 = arith.constant 0 : i32
    return %c0_i32, %c0_i32_0 : i32, i32
  }
  func.func @transform_5(%arg0: i32) -> (i32, i32) {
    %c0_i32 = arith.constant 0 : i32
    %c0_i32_0 = arith.constant 0 : i32
    %c0_i32_1 = arith.constant 0 : i32
    return %c0_i32, %c0_i32_0 : i32, i32
  }
  func.func @transform_6(%arg0: i32) -> (i32, i32) {
    %c0_i32 = arith.constant 0 : i32
    %c0_i32_0 = arith.constant 0 : i32
    %c0_i32_1 = arith.constant 0 : i32
    return %c0_i32, %c0_i32_0 : i32, i32
  }
  func.func @transform_7(%arg0: i32) -> (i32, i32) {
    %c0_i32 = arith.constant 0 : i32
    %c0_i32_0 = arith.constant 0 : i32
    %c0_i32_1 = arith.constant 0 : i32
    return %c0_i32, %c0_i32_0 : i32, i32
  }
  func.func @transform_8(%arg0: i32) -> (i32, i32) {
    %c0_i32 = arith.constant 0 : i32
    %c0_i32_0 = arith.constant 0 : i32
    %c0_i32_1 = arith.constant 0 : i32
    return %c0_i32, %c0_i32_0 : i32, i32
  }
}

</mosaic_0001>

<llo_original>
// kernel: tpu_custom_call.1
$region0: #{tpu_custom_call.1}
  #allocation0 [shape = 'u32[]', space=smem, size = 0x4, offset = 0x4, fixed_abs, tag = 'smem constant byte address 0x4 - core index']
  #allocation1 [shape = 'u32[144,128]{1,0:T(1,128)}', space=vmem, size = 0x12000, scoped, tag = 'internal scratch']
  %s0 = inlined_call_operand.vmem [shape: f32[8,16], index: 0, kind: input, shape index: {}]
  %s1 = inlined_call_operand.vmem [shape: f32[16,64], index: 1, kind: input, shape index: {}]
  %s2 = inlined_call_operand.vmem [shape: f32[1,64], index: 2, kind: input, shape index: {}]
  %s3 = inlined_call_operand.vmem [shape: f32[64,8], index: 3, kind: input, shape index: {}]
  %s4 = inlined_call_operand.vmem [shape: f32[1,8], index: 4, kind: input, shape index: {}]
  %s5 = inlined_call_operand.vmem [shape: f32[64,8], index: 5, kind: input, shape index: {}]
  %s6 = inlined_call_operand.vmem [shape: f32[1,8], index: 6, kind: input, shape index: {}]
  %s7 = inlined_call_operand.hbm [shape: f32[8,8], index: 7, kind: output, shape index: {0}]
  %s8 = inlined_call_operand.hbm [shape: f32[8,8], index: 8, kind: output, shape index: {1}]
  %9 = xla_tuple %s7, %s8
  %s10 = sld [smem:[#allocation0]]
  $region46: #{tpu_custom_call.1} parent=0
    _
  %s12 = ssub.s32 1, %s10
  %s13 = scalar_select 0, %s12, %s10
  $region1: #{tpu_custom_call.1} parent=0
    #allocation2 [shape = 'u8[4096]{0}', space=vmem, size = 0x1000, scoped, tag = 'output window, operand 0, single buffered']
    #allocation3 [shape = 's32[1]{0}', space=sflag, size = 0x4, scoped, tag = 'scoped memory for tpu_custom_call.1']
    #allocation4 [shape = 'u8[4096]{0}', space=vmem, size = 0x1000, scoped, tag = 'output window, operand 1, single buffered']
    #allocation5 [shape = 's32[1]{0}', space=sflag, size = 0x4, scoped, tag = 'scoped memory for tpu_custom_call.1']
    %14 = vsyncpa [#allocation3], 0
    %15 = vsyncpa [#allocation5], 0
    // Predicated region
    $region2: #{tpu_custom_call.1} parent=1 // pred_check
      _
    $region3: #{tpu_custom_call.1} parent=1 // pred_check_branch
      %17 = sbr.rel (0) target = $region5
    $region4: #{tpu_custom_call.1} parent=1 // pred_region
      _
    $region5: #{tpu_custom_call.1} parent=1 // pred_fallthru
      _
    // Predicated region
    $region6: #{tpu_custom_call.1} parent=1 // pred_check
      _
    $region7: #{tpu_custom_call.1} parent=1 // pred_check_branch
      %19 = sbr.rel (0) target = $region9
    $region8: #{tpu_custom_call.1} parent=1 // pred_region
      _
    $region9: #{tpu_custom_call.1} parent=1 // pred_fallthru
      _
    // Predicated region
    $region10: #{tpu_custom_call.1} parent=1 // pred_check
      _
    $region11: #{tpu_custom_call.1} parent=1 // pred_check_branch
      %21 = sbr.rel (0) target = $region13
    $region12: #{tpu_custom_call.1} parent=1 // pred_region
      _
    $region13: #{tpu_custom_call.1} parent=1 // pred_fallthru
      _
    // Predicated region
    $region14: #{tpu_custom_call.1} parent=1 // pred_check
      _
    $region15: #{tpu_custom_call.1} parent=1 // pred_check_branch
      %23 = sbr.rel (0) target = $region17
    $region16: #{tpu_custom_call.1} parent=1 // pred_region
      _
    $region17: #{tpu_custom_call.1} parent=1 // pred_fallthru
      _
    // Predicated region
    $region18: #{tpu_custom_call.1} parent=1 // pred_check
      _
    $region19: #{tpu_custom_call.1} parent=1 // pred_check_branch
      %25 = sbr.rel (0) target = $region21
    $region20: #{tpu_custom_call.1} parent=1 // pred_region
      _
    $region21: #{tpu_custom_call.1} parent=1 // pred_fallthru
      _
    // Predicated region
    $region22: #{tpu_custom_call.1} parent=1 // pred_check
      _
    $region23: #{tpu_custom_call.1} parent=1 // pred_check_branch
      %27 = sbr.rel (0) target = $region25
    $region24: #{tpu_custom_call.1} parent=1 // pred_region
      _
    $region25: #{tpu_custom_call.1} parent=1 // pred_fallthru
      _
    // Predicated region
    $region26: #{tpu_custom_call.1} parent=1 // pred_check
      _
    $region27: #{tpu_custom_call.1} parent=1 // pred_check_branch
      %29 = sbr.rel (0) target = $region29
    $region28: #{tpu_custom_call.1} parent=1 // pred_region
      _
    $region29: #{tpu_custom_call.1} parent=1 // pred_fallthru
      _
    %v30 = vld [vmem:[%s0] sm:$0xff]
    %v31 = vld [vmem:[%s1] sm:$0xff]
    %v32 = vld [vmem:[%s1 + $0x8] sm:$0xff]
    %v33 = vld [vmem:[%s2] sm:$0x1]
    %v35 = vlaneseq
    %v36 = vshrl.u32 %v35, 7
    %v37 = vsub.s32 0, %v36
    %v38 = vrot.slane %v33, %v37
    %vm40 = vcmask 130048
    %v42 = vsel %vm40, %v30, 0
    %44 = vmatprep.subr.mxu0 0.0
    %45 = vmatpush1.msra.mxu0 %v31
    %46 = vmatprep.subr.mxu0 0.0
    %47 = vmatpush1.msra.mxu0 %v32
    %48 = vmatprep.subr.mxu0 0.0
    %49 = vmatpush1.msra.mxu0 0.0
    %50 = vmatprep.subr.mxu0 0.0
    %51 = vmatpush1.msra.mxu0 0.0
    %52 = vmatprep.subr.mxu0 0.0
    %53 = vmatpush1.msra.mxu0 0.0
    %54 = vmatprep.subr.mxu0 0.0
    %55 = vmatpush1.msra.mxu0 0.0
    %56 = vmatprep.subr.mxu0 0.0
    %57 = vmatpush1.msra.mxu0 0.0
    %58 = vmatprep.subr.mxu0 0.0
    %59 = vmatpush1.msra.mxu0 0.0
    %60 = vmatprep.subr.mxu0 0.0
    %61 = vmatpush1.msra.mxu0 0.0
    %62 = vmatprep.subr.mxu0 0.0
    %63 = vmatpush1.msra.mxu0 0.0
    %64 = vmatprep.subr.mxu0 0.0
    %65 = vmatpush1.msra.mxu0 0.0
    %66 = vmatprep.subr.mxu0 0.0
    %67 = vmatpush1.msra.mxu0 0.0
    %68 = vmatprep.subr.mxu0 0.0
    %69 = vmatpush1.msra.mxu0 0.0
    %70 = vmatprep.subr.mxu0 0.0
    %71 = vmatpush1.msra.mxu0 0.0
    %72 = vmatprep.subr.mxu0 0.0
    %73 = vmatpush1.msra.mxu0 0.0
    %74 = vmatprep.subr.mxu0 0.0
    %75 = vmatpush1.msra.mxu0 0.0
    %76 = vmatprep.subr.mxu0 0.0
    %77 = vmatpush1.msra.mxu0 0.0
    %78 = vmatprep.subr.mxu0 0.0
    %79 = vmatpush1.msra.mxu0 0.0
    %80 = vmatprep.subr.mxu0 0.0
    %81 = vmatpush1.msra.mxu0 0.0
    %82 = vmatprep.subr.mxu0 0.0
    %83 = vmatpush1.msra.mxu0 0.0
    %84 = vmatprep.subr.mxu0 0.0
    %85 = vmatpush1.msra.mxu0 0.0
    %86 = vmatprep.subr.mxu0 0.0
    %87 = vmatpush1.msra.mxu0 0.0
    %88 = vmatprep.subr.mxu0 0.0
    %89 = vmatpush1.msra.mxu0 0.0
    %90 = vmatprep.subr.mxu0 0.0
    %91 = vmatpush1.msra.mxu0 0.0
    %92 = vmatprep.subr.mxu0 0.0
    %93 = vmatpush1.msra.mxu0 0.0
    %94 = vmatprep.subr.mxu0 0.0
    %95 = vmatpush1.msra.mxu0 0.0
    %96 = vmatprep.subr.mxu0 0.0
    %97 = vmatpush1.msra.mxu0 0.0
    %98 = vmatprep.subr.mxu0 0.0
    %99 = vmatpush1.msra.mxu0 0.0
    %100 = vmatprep.subr.mxu0 0.0
    %101 = vmatpush1.msra.mxu0 0.0
    %102 = vmatprep.subr.mxu0 0.0
    %103 = vmatpush1.msra.mxu0 0.0
    %104 = vmatprep.subr.mxu0 0.0
    %105 = vmatpush1.msra.mxu0 0.0
    %106 = vmatprep.subr.mxu0 0.0
    %107 = vmatpush1.msra.mxu0 0.0
    %108 = vmatprep.mubr.f32.mxu0 0.0
    %109 = vmatmul.mubr.f32.gmra.mrb[0].mxu0 %v42
    %v110 = vpop.f32.mrb[0].mxu0
    %v111 = vadd.f32 %v38, %v110
    %v112 = vpop.f32.mrb[0].mxu0
    %113 = vdwg.mxu0
    %v114 = vmax.f32 %v111, 0.0
    %v115 = vld [vmem:[%s3] sm:$0xff]
    %v116 = vld [vmem:[%s3 + $0x8] sm:$0xff]
    %v117 = vld [vmem:[%s3 + $0x10] sm:$0xff]
    %v118 = vld [vmem:[%s3 + $0x18] sm:$0xff]
    %v119 = vld [vmem:[%s3 + $0x20] sm:$0xff]
    %v120 = vld [vmem:[%s3 + $0x28] sm:$0xff]
    %v121 = vld [vmem:[%s3 + $0x30] sm:$0xff]
    %v122 = vld [vmem:[%s3 + $0x38] sm:$0xff]
    %v123 = vld [vmem:[%s4] sm:$0x1]
    %v125 = vlaneseq
    %v126 = vshrl.u32 %v125, 7
    %v127 = vsub.s32 0, %v126
    %v128 = vrot.slane %v123, %v127
    %vm130 = vcmask 523264
    %v132 = vsel %vm130, %v114, 0
    %134 = vmatprep.subr.mxu0 0.0
    %135 = vmatpush1.msra.mxu0 %v115
    %136 = vmatprep.subr.mxu0 0.0
    %137 = vmatpush1.msra.mxu0 %v116
    %138 = vmatprep.subr.mxu0 0.0
    %139 = vmatpush1.msra.mxu0 %v117
    %140 = vmatprep.subr.mxu0 0.0
    %141 = vmatpush1.msra.mxu0 %v118
    %142 = vmatprep.subr.mxu0 0.0
    %143 = vmatpush1.msra.mxu0 %v119
    %144 = vmatprep.subr.mxu0 0.0
    %145 = vmatpush1.msra.mxu0 %v120
    %146 = vmatprep.subr.mxu0 0.0
    %147 = vmatpush1.msra.mxu0 %v121
    %148 = vmatprep.subr.mxu0 0.0
    %149 = vmatpush1.msra.mxu0 %v122
    %150 = vmatprep.subr.mxu0 0.0
    %151 = vmatpush1.msra.mxu0 0.0
    %152 = vmatprep.subr.mxu0 0.0
    %153 = vmatpush1.msra.mxu0 0.0
    %154 = vmatprep.subr.mxu0 0.0
    %155 = vmatpush1.msra.mxu0 0.0
    %156 = vmatprep.subr.mxu0 0.0
    %157 = vmatpush1.msra.mxu0 0.0
    %158 = vmatprep.subr.mxu0 0.0
    %159 = vmatpush1.msra.mxu0 0.0
    %160 = vmatprep.subr.mxu0 0.0
    %161 = vmatpush1.msra.mxu0 0.0
    %162 = vmatprep.subr.mxu0 0.0
    %163 = vmatpush1.msra.mxu0 0.0
    %164 = vmatprep.subr.mxu0 0.0
    %165 = vmatpush1.msra.mxu0 0.0
    %166 = vmatprep.subr.mxu0 0.0
    %167 = vmatpush1.msra.mxu0 0.0
    %168 = vmatprep.subr.mxu0 0.0
    %169 = vmatpush1.msra.mxu0 0.0
    %170 = vmatprep.subr.mxu0 0.0
    %171 = vmatpush1.msra.mxu0 0.0
    %172 = vmatprep.subr.mxu0 0.0
    %173 = vmatpush1.msra.mxu0 0.0
    %174 = vmatprep.subr.mxu0 0.0
    %175 = vmatpush1.msra.mxu0 0.0
    %176 = vmatprep.subr.mxu0 0.0
    %177 = vmatpush1.msra.mxu0 0.0
    %178 = vmatprep.subr.mxu0 0.0
    %179 = vmatpush1.msra.mxu0 0.0
    %180 = vmatprep.subr.mxu0 0.0
    %181 = vmatpush1.msra.mxu0 0.0
    %182 = vmatprep.subr.mxu0 0.0
    %183 = vmatpush1.msra.mxu0 0.0
    %184 = vmatprep.subr.mxu0 0.0
    %185 = vmatpush1.msra.mxu0 0.0
    %186 = vmatprep.subr.mxu0 0.0
    %187 = vmatpush1.msra.mxu0 0.0
    %188 = vmatprep.subr.mxu0 0.0
    %189 = vmatpush1.msra.mxu0 0.0
    %190 = vmatprep.subr.mxu0 0.0
    %191 = vmatpush1.msra.mxu0 0.0
    %192 = vmatprep.subr.mxu0 0.0
    %193 = vmatpush1.msra.mxu0 0.0
    %194 = vmatprep.subr.mxu0 0.0
    %195 = vmatpush1.msra.mxu0 0.0
    %196 = vmatprep.subr.mxu0 0.0
    %197 = vmatpush1.msra.mxu0 0.0
    %198 = vmatprep.mubr.f32.mxu0 0.0
    %199 = vmatmul.mubr.f32.gmra.mrb[0].mxu0 %v132
    %v200 = vpop.f32.mrb[0].mxu0
    %v201 = vadd.f32 %v128, %v200
    %v202 = vpop.f32.mrb[0].mxu0
    %203 = vdwg.mxu0
    %v204 = vld [vmem:[%s5] sm:$0xff]
    %v205 = vld [vmem:[%s5 + $0x8] sm:$0xff]
    %v206 = vld [vmem:[%s5 + $0x10] sm:$0xff]
    %v207 = vld [vmem:[%s5 + $0x18] sm:$0xff]
    %v208 = vld [vmem:[%s5 + $0x20] sm:$0xff]
    %v209 = vld [vmem:[%s5 + $0x28] sm:$0xff]
    %v210 = vld [vmem:[%s5 + $0x30] sm:$0xff]
    %v211 = vld [vmem:[%s5 + $0x38] sm:$0xff]
    %v212 = vld [vmem:[%s6] sm:$0x1]
    %v214 = vlaneseq
    %v215 = vshrl.u32 %v214, 7
    %v216 = vsub.s32 0, %v215
    %v217 = vrot.slane %v212, %v216
    %219 = vmatprep.subr.mxu0 0.0
    %220 = vmatpush1.msra.mxu0 %v204
    %221 = vmatprep.subr.mxu0 0.0
    %222 = vmatpush1.msra.mxu0 %v205
    %223 = vmatprep.subr.mxu0 0.0
    %224 = vmatpush1.msra.mxu0 %v206
    %225 = vmatprep.subr.mxu0 0.0
    %226 = vmatpush1.msra.mxu0 %v207
    %227 = vmatprep.subr.mxu0 0.0
    %228 = vmatpush1.msra.mxu0 %v208
    %229 = vmatprep.subr.mxu0 0.0
    %230 = vmatpush1.msra.mxu0 %v209
    %231 = vmatprep.subr.mxu0 0.0
    %232 = vmatpush1.msra.mxu0 %v210
    %233 = vmatprep.subr.mxu0 0.0
    %234 = vmatpush1.msra.mxu0 %v211
    %235 = vmatprep.subr.mxu0 0.0
    %236 = vmatpush1.msra.mxu0 0.0
    %237 = vmatprep.subr.mxu0 0.0
    %238 = vmatpush1.msra.mxu0 0.0
    %239 = vmatprep.subr.mxu0 0.0
    %240 = vmatpush1.msra.mxu0 0.0
    %241 = vmatprep.subr.mxu0 0.0
    %242 = vmatpush1.msra.mxu0 0.0
    %243 = vmatprep.subr.mxu0 0.0
    %244 = vmatpush1.msra.mxu0 0.0
    %245 = vmatprep.subr.mxu0 0.0
    %246 = vmatpush1.msra.mxu0 0.0
    %247 = vmatprep.subr.mxu0 0.0
    %248 = vmatpush1.msra.mxu0 0.0
    %249 = vmatprep.subr.mxu0 0.0
    %250 = vmatpush1.msra.mxu0 0.0
    %251 = vmatprep.subr.mxu0 0.0
    %252 = vmatpush1.msra.mxu0 0.0
    %253 = vmatprep.subr.mxu0 0.0
    %254 = vmatpush1.msra.mxu0 0.0
    %255 = vmatprep.subr.mxu0 0.0
    %256 = vmatpush1.msra.mxu0 0.0
    %257 = vmatprep.subr.mxu0 0.0
    %258 = vmatpush1.msra.mxu0 0.0
    %259 = vmatprep.subr.mxu0 0.0
    %260 = vmatpush1.msra.mxu0 0.0
    %261 = vmatprep.subr.mxu0 0.0
    %262 = vmatpush1.msra.mxu0 0.0
    %263 = vmatprep.subr.mxu0 0.0
    %264 = vmatpush1.msra.mxu0 0.0
    %265 = vmatprep.subr.mxu0 0.0
    %266 = vmatpush1.msra.mxu0 0.0
    %267 = vmatprep.subr.mxu0 0.0
    %268 = vmatpush1.msra.mxu0 0.0
    %269 = vmatprep.subr.mxu0 0.0
    %270 = vmatpush1.msra.mxu0 0.0
    %271 = vmatprep.subr.mxu0 0.0
    %272 = vmatpush1.msra.mxu0 0.0
    %273 = vmatprep.subr.mxu0 0.0
    %274 = vmatpush1.msra.mxu0 0.0
    %275 = vmatprep.subr.mxu0 0.0
    %276 = vmatpush1.msra.mxu0 0.0
    %277 = vmatprep.subr.mxu0 0.0
    %278 = vmatpush1.msra.mxu0 0.0
    %279 = vmatprep.subr.mxu0 0.0
    %280 = vmatpush1.msra.mxu0 0.0
    %281 = vmatprep.subr.mxu0 0.0
    %282 = vmatpush1.msra.mxu0 0.0
    %283 = vmatprep.mubr.f32.mxu0 0.0
    %284 = vmatmul.mubr.f32.gmra.mrb[0].mxu0 %v132
    %v285 = vpop.f32.mrb[0].mxu0
    %v286 = vadd.f32 %v217, %v285
    %v287 = vpop.f32.mrb[0].mxu0
    %288 = vdwg.mxu0
    %v289 = vmax.f32 %v286, 0.0
    %v290 = vand.u32 2147483647, %v286
    %v291 = vsub.f32 0.0, %v290
    %v292 = vmul.f32 %v291, 1.442695
    %v293 = vpow.pop %v292
    %v294 = vadd.f32 %v293, 1.0
    %v295 = vlog2.pop %v294
    %v296 = vmul.f32 %v295, 0.6931472
    %v297 = vmul.f32 -0.5, %v293
    %v298 = vadd.f32 %v297, 1.0
    %v299 = vmul.f32 %v298, %v293
    %v300 = vand.u32 2147483647, %v293
    %vm301 = vcmp.lt.f32.partialorder %v300, 0.0004427343
    %v302 = vsel %vm301, %v299, %v296
    %v303 = vadd.f32 %v289, %v302
    %vm304 = vcmask 64512
    %305 = vst.msk [vmem:[#allocation2] sm:$0xff] %vm304, %v201
    %306 = vst.msk [vmem:[#allocation4] sm:$0xff] %vm304, %v303
    // Predicated region
    $region30: #{tpu_custom_call.1} parent=1 // pred_check
      _
    $region31: #{tpu_custom_call.1} parent=1 // pred_check_branch
      %308 = sbr.rel (0) target = $region33
    $region32: #{tpu_custom_call.1} parent=1 // pred_region
      %s310 = ssub.s32 128, 128
      %311 = vsyncadd [#allocation3], %s310
      %s313 = sshll.u32 [#allocation2], 4
      %s314 = int_to_ptr.vmem [resolvable:$true] %s313
      %316 = dma.vmem_to_hbm [thread:$0]  %s314, 128, %s7, [#allocation3]
    $region33: #{tpu_custom_call.1} parent=1 // pred_fallthru
      _
    // Predicated region
    $region34: #{tpu_custom_call.1} parent=1 // pred_check
      _
    $region35: #{tpu_custom_call.1} parent=1 // pred_check_branch
      %318 = sbr.rel (0) target = $region37
    $region36: #{tpu_custom_call.1} parent=1 // pred_region
      %s320 = ssub.s32 128, 128
      %321 = vsyncadd [#allocation5], %s320
      %s323 = sshll.u32 [#allocation4], 4
      %s324 = int_to_ptr.vmem [resolvable:$true] %s323
      %326 = dma.vmem_to_hbm [thread:$0]  %s324, 128, %s8, [#allocation5]
    $region37: #{tpu_custom_call.1} parent=1 // pred_fallthru
      _
    // Predicated region
    $region38: #{tpu_custom_call.1} parent=1 // pred_check
      _
    $region39: #{tpu_custom_call.1} parent=1 // pred_check_branch
      %328 = sbr.rel (0) target = $region41
    $region40: #{tpu_custom_call.1} parent=1 // pred_region
      %329 = dma.done [#allocation3], 128
    $region41: #{tpu_custom_call.1} parent=1 // pred_fallthru
      _
    // Predicated region
    $region42: #{tpu_custom_call.1} parent=1 // pred_check
      _
    $region43: #{tpu_custom_call.1} parent=1 // pred_check_branch
      %331 = sbr.rel (0) target = $region45
    $region44: #{tpu_custom_call.1} parent=1 // pred_region
      %332 = dma.done [#allocation5], 128
    $region45: #{tpu_custom_call.1} parent=1 // pred_fallthru
      _
    %333 = vsyncpa [#allocation3], 1
    %334 = vsyncpa [#allocation5], 1

</llo_original>
